<compile_context>
chip_gen: v6e
topology: v6e:2x2x1
jax: 0.10.0
libtpu: 0.0.40
codegen_flags: <defaults>
</compile_context>

<pallas_src>
import jax
import jax.numpy as jnp
from jax.experimental import pallas as pl
from jax.experimental.pallas import tpu as pltpu


_LANES = 128
_CHUNK_ROWS = 128                      # rows folded per unrolled inner step (mult. of 8 and 16)
_TARGET_TILE_BYTES = 2 * 1024 * 1024   # per-input HBM bytes per grid step (~85%+ of roofline)


def _make_block_kernel(block_rows: int):
    """Streaming reduction over one (block_rows, 128) tile per input per grid step.

    Writes per-block vreg-shaped partials (no carried accumulator, no scratch),
    so the grid axis is stateless and can be marked "parallel".
    """
    n_chunks = block_rows // _CHUNK_ROWS

    def kernel(yt_ref, yp_ref, out_ref):
        s_acc = jnp.zeros((8, _LANES), jnp.float32)   # partial of sum(yt) + sum(yp)
        x_acc = jnp.zeros((8, _LANES), jnp.float32)   # partial of sum(yt * yp)
        # Fully-unrolled static chunk loop: each chunk is a handful of vregs,
        # so the running partials stay in registers (pure VPU adds/muls).
        for c in range(n_chunks):
            r0 = c * _CHUNK_ROWS
            yt = yt_ref[r0:r0 + _CHUNK_ROWS, :].astype(jnp.float32)
            yp = yp_ref[r0:r0 + _CHUNK_ROWS, :].astype(jnp.float32)
            s_acc = s_acc + (yt + yp).reshape(_CHUNK_ROWS // 8, 8, _LANES).sum(axis=0)
            x_acc = x_acc + (yt * yp).reshape(_CHUNK_ROWS // 8, 8, _LANES).sum(axis=0)
        out_ref[0, 0:8, :] = s_acc
        out_ref[0, 8:16, :] = x_acc

    return kernel


def _partial_sums_blocked(yt2: jax.Array, yp2: jax.Array, block_rows: int, nfull: int):
    """(S, X) partial sums over the first nfull*block_rows rows of (rows, 128) inputs."""
    kernel = _make_block_kernel(block_rows)
    partials = pl.pallas_call(
        kernel,
        out_shape=jax.ShapeDtypeStruct((nfull, 16, _LANES), jnp.float32),
        grid_spec=pltpu.PrefetchScalarGridSpec(
            num_scalar_prefetch=0,
            grid=(nfull,),
            in_specs=[
                pl.BlockSpec((block_rows, _LANES), lambda r: (r, 0)),
                pl.BlockSpec((block_rows, _LANES), lambda r: (r, 0)),
            ],
            out_specs=pl.BlockSpec((1, 16, _LANES), lambda r: (r, 0, 0)),
        ),
        compiler_params=pltpu.CompilerParams(
            dimension_semantics=("parallel",),   # stateless blocks -> shardable across TCs
        ),
    )(yt2, yp2)
    s_sum = jnp.sum(partials[:, 0:8, :])
    x_sum = jnp.sum(partials[:, 8:16, :])
    return s_sum, x_sum


def _small_kernel(yt_ref, yp_ref, out_ref):
    yt = yt_ref[...].astype(jnp.float32)
    yp = yp_ref[...].astype(jnp.float32)
    out_ref[0] = jnp.sum(yt) + jnp.sum(yp)
    out_ref[1] = jnp.sum(yt * yp)


def _partial_sums_small(yt2: jax.Array, yp2: jax.Array):
    """(S, X) for tiny inputs (rows < 128): one whole-array block, scalar SMEM output."""
    rows = yt2.shape[0]
    out = pl.pallas_call(
        _small_kernel,
        out_shape=jax.ShapeDtypeStruct((2,), jnp.float32),
        grid_spec=pltpu.PrefetchScalarGridSpec(
            num_scalar_prefetch=0,
            grid=(1,),
            in_specs=[
                pl.BlockSpec((rows, _LANES), lambda i: (0, 0)),
                pl.BlockSpec((rows, _LANES), lambda i: (0, 0)),
            ],
            out_specs=pl.BlockSpec(memory_space=pltpu.SMEM),
        ),
        compiler_params=pltpu.CompilerParams(
            dimension_semantics=("arbitrary",),
        ),
    )(yt2, yp2)
    return out[0], out[1]


def dice_loss(y_true: jax.Array, y_pred: jax.Array) -> jax.Array:
    """Pallas dice loss (batch=True). Returns a scalar float32."""
    assert y_true.shape == y_pred.shape, "y_true / y_pred shape mismatch"

    total = 1
    for d in y_true.shape:
        total *= d

    # Contiguous ravel: free reshape, keeps the narrow HBM dtype.
    yt_flat = y_true.reshape(-1)
    yp_flat = y_pred.reshape(-1)

    rows = total // _LANES

    # Byte-based tile sizing: ~2 MiB per input per grid step in its HBM dtype,
    # rounded to a multiple of the 128-row chunk (itself a multiple of 8/16).
    itemsize = max(y_true.dtype.itemsize, y_pred.dtype.itemsize)
    target_rows = (_TARGET_TILE_BYTES // (_LANES * itemsize)) // _CHUNK_ROWS * _CHUNK_ROWS
    target_rows = max(_CHUNK_ROWS, target_rows)

    s_sum = jnp.zeros((), jnp.float32)
    x_sum = jnp.zeros((), jnp.float32)

    if rows >= _CHUNK_ROWS:
        block_rows = min(target_rows, (rows // _CHUNK_ROWS) * _CHUNK_ROWS)
        nfull = rows // block_rows
        covered = nfull * block_rows
        # NOTE: when total % 128 != 0 this prefix slice may materialize a copy;
        # typical CNN shapes (total a multiple of 128) make it a free reshape.
        yt2 = yt_flat[:rows * _LANES].reshape(rows, _LANES)
        yp2 = yp_flat[:rows * _LANES].reshape(rows, _LANES)
        s_b, x_b = _partial_sums_blocked(yt2, yp2, block_rows, nfull)
        s_sum = s_sum + s_b
        x_sum = x_sum + x_b
        done = covered * _LANES
    elif rows > 0:
        yt2 = yt_flat[:rows * _LANES].reshape(rows, _LANES)
        yp2 = yp_flat[:rows * _LANES].reshape(rows, _LANES)
        s_b, x_b = _partial_sums_small(yt2, yp2)
        s_sum = s_sum + s_b
        x_sum = x_sum + x_b
        done = rows * _LANES
    else:
        done = 0

    if done < total:
        # Leftover rows of the last partial block (< block_rows rows) plus the
        # <128-element tail: small, folded in with plain JAX (single read).
        yt_t = yt_flat[done:].astype(jnp.float32)
        yp_t = yp_flat[done:].astype(jnp.float32)
        s_sum = s_sum + jnp.sum(yt_t) + jnp.sum(yp_t)
        x_sum = x_sum + jnp.sum(yt_t * yp_t)

    smooth = 0.0  # matches the reference; all-zero inputs -> 0/0 NaN, same as PyTorch
    score = (2.0 * x_sum + smooth) / (s_sum + smooth)
    return (1.0 - score).astype(jnp.float32)


def _reference_dice_loss(y_true, y_pred):
    """Pure-JAX reference matching the PyTorch module (batch=True)."""
    y_true = y_true.astype(jnp.float32)
    y_pred = y_pred.astype(jnp.float32)
    i = jnp.sum(y_true)
    j = jnp.sum(y_pred)
    inter = jnp.sum(y_true * y_pred)
    return 1.0 - (2.0 * inter) / (i + j)


def _run_case(key, shape, dtype=jnp.float32):
    k1, k2 = jax.random.split(key)
    # Mimic segmentation inputs: y_true binary mask, y_pred in (0, 1).
    y_true = (jax.random.uniform(k1, shape) > 0.5).astype(dtype)
    y_pred = jax.nn.sigmoid(jax.random.normal(k2, shape)).astype(dtype)

    loss = jax.block_until_ready(dice_loss(y_true, y_pred))
    ref = _reference_dice_loss(y_true, y_pred)
    assert jnp.allclose(loss, ref, rtol=1e-4, atol=1e-5), (shape, dtype, loss, ref)
    return loss


if __name__ == "__main__":
    key = jax.random.PRNGKey(0)
    keys = jax.random.split(key, 5)

    # Primary small case: NCHW batch=2, channels=4, spatial=16x16 (tiny-kernel path).
    _run_case(keys[0], (2, 4, 16, 16))

    # rows=6 with a 90-element tail (tiny-kernel path + JAX tail).
    _run_case(keys[1], (2, 3, 11, 13))

    # Blocked path with leftover rows and a tail (rows=4227 -> 1 full block + remainder).
    _run_case(keys[2], (1, 1, 700, 773))

    # Clean multi-block f32 path (rows=8192 -> 2 full 4096-row blocks).
    _run_case(keys[3], (2, 8, 256, 256))

    # bf16 inputs (rows=8192 -> one 8192-row bf16 block; per-tile cast in kernel).
    _run_case(keys[4], (2, 8, 256, 256), dtype=jnp.bfloat16)

    print("KERNEL_OK")
</pallas_src>

<mosaic_0001>
module attributes {stable_mosaic.version = 11 : i64} {
  func.func @_small_kernel(%arg0: i32, %arg1: memref<16x128xf32, #tpu.memory_space<vmem>>, %arg2: memref<16x128xf32, #tpu.memory_space<vmem>>, %arg3: memref<2xf32, #tpu.memory_space<smem>>) attributes {dimension_semantics = [#tpu.dimension_semantics<arbitrary>], iteration_bounds = array<i64: 1>, scalar_prefetch = 0 : i64, scratch_operands = 0 : i64, tpu.core_type = #tpu.core_type<tc>, window_params = [{pipeline_mode = #tpu.pipeline_mode<synchronous>, transform_indices = @transform_0, window_bounds = array<i64: 16, 128>}, {pipeline_mode = #tpu.pipeline_mode<synchronous>, transform_indices = @transform_1, window_bounds = array<i64: 16, 128>}, {transform_indices = @transform_2, window_bounds = array<i64: 2>}]} {
    %c0 = arith.constant 0 : index
    %c0_0 = arith.constant 0 : index
    %0 = vector.load %arg1[%c0, %c0_0] : memref<16x128xf32, #tpu.memory_space<vmem>>, vector<16x128xf32>
    %c0_1 = arith.constant 0 : index
    %c0_2 = arith.constant 0 : index
    %1 = vector.load %arg2[%c0_1, %c0_2] : memref<16x128xf32, #tpu.memory_space<vmem>>, vector<16x128xf32>
    %2 = vector.shape_cast %0 : vector<16x128xf32> to vector<1x16x128xf32>
    %cst = arith.constant dense<0.000000e+00> : vector<1xf32>
    %3 = vector.multi_reduction <add>, %2, %cst [1, 2] : vector<1x16x128xf32> to vector<1xf32>
    %4 = vector.shape_cast %3 : vector<1xf32> to vector<1x1x1xf32>
    %5 = vector.extract %4[0, 0, 0] : f32 from vector<1x1x1xf32>
    %6 = vector.shape_cast %1 : vector<16x128xf32> to vector<1x16x128xf32>
    %cst_3 = arith.constant dense<0.000000e+00> : vector<1xf32>
    %7 = vector.multi_reduction <add>, %6, %cst_3 [1, 2] : vector<1x16x128xf32> to vector<1xf32>
    %8 = vector.shape_cast %7 : vector<1xf32> to vector<1x1x1xf32>
    %9 = vector.extract %8[0, 0, 0] : f32 from vector<1x1x1xf32>
    %10 = arith.addf %5, %9 : f32
    %c0_4 = arith.constant 0 : index
    %11 = memref.load %arg3[%c0_4] : memref<2xf32, #tpu.memory_space<smem>>
    memref.store %10, %arg3[%c0_4] : memref<2xf32, #tpu.memory_space<smem>>
    %12 = arith.mulf %0, %1 : vector<16x128xf32>
    %13 = vector.shape_cast %12 : vector<16x128xf32> to vector<1x16x128xf32>
    %cst_5 = arith.constant dense<0.000000e+00> : vector<1xf32>
    %14 = vector.multi_reduction <add>, %13, %cst_5 [1, 2] : vector<1x16x128xf32> to vector<1xf32>
    %15 = vector.shape_cast %14 : vector<1xf32> to vector<1x1x1xf32>
    %16 = vector.extract %15[0, 0, 0] : f32 from vector<1x1x1xf32>
    %c1 = arith.constant 1 : index
    %17 = memref.load %arg3[%c1] : memref<2xf32, #tpu.memory_space<smem>>
    memref.store %16, %arg3[%c1] : memref<2xf32, #tpu.memory_space<smem>>
    return
  }
  func.func @transform_0(%arg0: i32) -> (i32, i32) {
    %c0_i32 = arith.constant 0 : i32
    %c0_i32_0 = arith.constant 0 : i32
    %c0_i32_1 = arith.constant 0 : i32
    return %c0_i32, %c0_i32_0 : i32, i32
  }
  func.func @transform_1(%arg0: i32) -> (i32, i32) {
    %c0_i32 = arith.constant 0 : i32
    %c0_i32_0 = arith.constant 0 : i32
    %c0_i32_1 = arith.constant 0 : i32
    return %c0_i32, %c0_i32_0 : i32, i32
  }
  func.func @transform_2(%arg0: i32) -> i32 {
    %c0_i32 = arith.constant 0 : i32
    %c0_i32_0 = arith.constant 0 : i32
    return %c0_i32 : i32
  }
}

</mosaic_0001>

<llo_original>
// kernel: tpu_custom_call.1
$region0: #{tpu_custom_call.1}
  #allocation0 [shape = 'u32[]', space=smem, size = 0x4, offset = 0x4, fixed_abs, tag = 'smem constant byte address 0x4 - core index']
  #allocation1 [shape = 'u32[144,128]{1,0:T(1,128)}', space=vmem, size = 0x12000, scoped, tag = 'internal scratch']
  %s0 = inlined_call_operand.hbm [shape: f32[16,128], index: 0, kind: input, shape index: {}]
  %s1 = inlined_call_operand.hbm [shape: f32[16,128], index: 1, kind: input, shape index: {}]
  %s2 = inlined_call_operand.hbm [shape: f32[2], index: 2, kind: output, shape index: {}]
  %s3 = sld [smem:[#allocation0]]
  $region26: #{tpu_custom_call.1} parent=0
    _
  %s5 = ssub.s32 1, %s3
  %s6 = scalar_select 0, %s5, %s3
  $region1: #{tpu_custom_call.1} parent=0
    #allocation2 [shape = 'u8[8192]{0}', space=vmem, size = 0x2000, scoped, tag = 'input window, operand 0, single buffered']
    #allocation3 [shape = 's32[1]{0}', space=sflag, size = 0x4, scoped, tag = 'scoped memory for tpu_custom_call.1']
    #allocation4 [shape = 's32[1]{0}', space=sflag, size = 0x4, scoped, tag = 'scoped memory for tpu_custom_call.1']
    #allocation5 [shape = 'u8[8192]{0}', space=vmem, size = 0x2000, scoped, tag = 'input window, operand 1, single buffered']
    #allocation6 [shape = 's32[1]{0}', space=sflag, size = 0x4, scoped, tag = 'scoped memory for tpu_custom_call.1']
    #allocation7 [shape = 'u8[512]{0}', space=smem, size = 0x200, scoped, tag = 'output window, operand 0, single buffered']
    %7 = vsyncpa [#allocation3], 0
    %8 = vsyncpa [#allocation6], 0
    %9 = vsyncpa [#allocation4], 0
    // Predicated region
    $region2: #{tpu_custom_call.1} parent=1 // pred_check
      _
    $region3: #{tpu_custom_call.1} parent=1 // pred_check_branch
      %11 = sbr.rel (0) target = $region5
    $region4: #{tpu_custom_call.1} parent=1 // pred_region
      %s13 = ssub.s32 256, 256
      %14 = vsyncadd [#allocation3], %s13
      %s15 = sshll.u32 [#allocation2], 4
      %s16 = int_to_ptr.vmem [resolvable:$true] %s15
      %21 = dma.hbm_to_vmem [thread:$0]  %s0, 256, %s16, [#allocation3], 128, 128, 8
    $region5: #{tpu_custom_call.1} parent=1 // pred_fallthru
      _
    // Predicated region
    $region6: #{tpu_custom_call.1} parent=1 // pred_check
      _
    $region7: #{tpu_custom_call.1} parent=1 // pred_check_branch
      %23 = sbr.rel (0) target = $region9
    $region8: #{tpu_custom_call.1} parent=1 // pred_region
      %s25 = ssub.s32 256, 256
      %26 = vsyncadd [#allocation6], %s25
      %s27 = sshll.u32 [#allocation5], 4
      %s28 = int_to_ptr.vmem [resolvable:$true] %s27
      %33 = dma.hbm_to_vmem [thread:$0]  %s1, 256, %s28, [#allocation6], 128, 128, 8
    $region9: #{tpu_custom_call.1} parent=1 // pred_fallthru
      _
    // Predicated region
    $region10: #{tpu_custom_call.1} parent=1 // pred_check
      _
    $region11: #{tpu_custom_call.1} parent=1 // pred_check_branch
      %35 = sbr.rel (0) target = $region13
    $region12: #{tpu_custom_call.1} parent=1 // pred_region
      %36 = dma.done [#allocation3], 256
    $region13: #{tpu_custom_call.1} parent=1 // pred_fallthru
      _
    // Predicated region
    $region14: #{tpu_custom_call.1} parent=1 // pred_check
      _
    $region15: #{tpu_custom_call.1} parent=1 // pred_check_branch
      %38 = sbr.rel (0) target = $region17
    $region16: #{tpu_custom_call.1} parent=1 // pred_region
      %39 = dma.done [#allocation6], 256
    $region17: #{tpu_custom_call.1} parent=1 // pred_fallthru
      _
    %v40 = vld [vmem:[#allocation2] sm:$0xff]
    %v41 = vld [vmem:[#allocation2 + $0x8] sm:$0xff]
    %v42 = vld [vmem:[#allocation5] sm:$0xff]
    %v43 = vld [vmem:[#allocation5 + $0x8] sm:$0xff]
    %v44 = vadd.f32 %v40, %v41
    %45 = vadd.xlane.f32.xlu0 %v44
    %v46 = vpop.xlane.xlu0 %45
    %v47 = vrot.slane %v46, 4
    %v48 = vadd.f32 %v46, %v47
    %v49 = vrot.slane %v48, 2
    %v50 = vadd.f32 %v48, %v49
    %v51 = vrot.slane %v50, 1
    %v52 = vadd.f32 %v50, %v51
    %s53 = vtos %v52
    %v54 = vadd.f32 %v42, %v43
    %55 = vadd.xlane.f32.xlu0 %v54
    %v56 = vpop.xlane.xlu0 %55
    %v57 = vrot.slane %v56, 4
    %v58 = vadd.f32 %v56, %v57
    %v59 = vrot.slane %v58, 2
    %v60 = vadd.f32 %v58, %v59
    %v61 = vrot.slane %v60, 1
    %v62 = vadd.f32 %v60, %v61
    %s63 = vtos %v62
    %s64 = sadd.f32 %s53, %s63
    %s65 = scalar_lea.smem [#allocation7], 0
    %66 = sst [smem:[%s65]] %s64
    %v67 = vmul.f32 %v40, %v42
    %v68 = vmul.f32 %v41, %v43
    %v69 = vadd.f32 %v67, %v68
    %70 = vadd.xlane.f32.xlu0 %v69
    %v71 = vpop.xlane.xlu0 %70
    %v72 = vrot.slane %v71, 4
    %v73 = vadd.f32 %v71, %v72
    %v74 = vrot.slane %v73, 2
    %v75 = vadd.f32 %v73, %v74
    %v76 = vrot.slane %v75, 1
    %v77 = vadd.f32 %v75, %v76
    %s78 = vtos %v77
    %s79 = scalar_lea.smem [#allocation7], 1
    %80 = sst [smem:[%s79]] %s78
    // Predicated region
    $region18: #{tpu_custom_call.1} parent=1 // pred_check
      _
    $region19: #{tpu_custom_call.1} parent=1 // pred_check_branch
      %82 = sbr.rel (0) target = $region21
    $region20: #{tpu_custom_call.1} parent=1 // pred_region
      %s84 = ssub.s32 16, 16
      %85 = vsyncadd [#allocation4], %s84
      %88 = dma.smem_to_hbm [#allocation7], 16, %s2, [#allocation4]
    $region21: #{tpu_custom_call.1} parent=1 // pred_fallthru
      _
    // Predicated region
    $region22: #{tpu_custom_call.1} parent=1 // pred_check
      _
    $region23: #{tpu_custom_call.1} parent=1 // pred_check_branch
      %90 = sbr.rel (0) target = $region25
    $region24: #{tpu_custom_call.1} parent=1 // pred_region
      %91 = dma.done [#allocation4], 16
    $region25: #{tpu_custom_call.1} parent=1 // pred_fallthru
      _
    %92 = sfence
    %93 = vsyncpa [#allocation3], 1
    %94 = vsyncpa [#allocation6], 1
    %95 = vsyncpa [#allocation4], 1

</llo_original>
